<compile_context>
chip_gen: v7x
topology: tpu7x:2x2x1
jax: 0.10.0
libtpu: 0.0.40
codegen_flags: <defaults>
</compile_context>

<pallas_src>
import functools

import jax
import jax.numpy as jnp
from jax.experimental import pallas as pl
from jax.experimental.pallas import tpu as pltpu


def _round_up(n, m):
    return ((n + m - 1) // m) * m


def _probe_kernel(x_ref, w_ref, b_ref, y_ref, xe_ref, acc_ref, acc_sm, *, inv_b):
    pid = pl.program_id(0)

    # Zero the accumulators on the first tile.
    @pl.when(pid == 0)
    def _init():
        acc_sm[0] = jnp.float32(0.0)
        acc_sm[1] = jnp.float32(0.0)

    x = x_ref[...]                      # [TILE_B, D] float32 (streamed tile)
    w = w_ref[...]                      # [D, C]      float32 (resident)
    b = b_ref[...]                      # [1, C]      float32 (resident)
    y = y_ref[...]                      # [TILE_B, 1] int32   (streamed tile)

    # logits = fc(x) = x @ W^T + b   (W stored pre-transposed as [D, C])
    logits = jnp.dot(x, w, preferred_element_type=jnp.float32) + b   # [TILE_B, C]

    # Numerically stable log_softmax along the class axis.
    m = jnp.max(logits, axis=-1, keepdims=True)
    lse = m + jnp.log(jnp.sum(jnp.exp(logits - m), axis=-1, keepdims=True))
    logp = logits - lse                                              # [TILE_B, C]

    n_classes = logits.shape[-1]
    class_ids = jax.lax.broadcasted_iota(jnp.int32, logits.shape, 1)  # [TILE_B, C]

    # Per-tile NLL loss *sum* (padded rows have y == -1 -> onehot all zero).
    onehot = (class_ids == y).astype(jnp.float32)                    # [TILE_B, C]
    loss_tile = -jnp.sum(onehot * logp)

    # Per-tile correct-prediction *count*.  argmax with first-max tie break
    # (min index among maxima), matching torch.argmax; runs on the XLU slot.
    is_max = logits == m
    pred = jnp.min(jnp.where(is_max, class_ids, n_classes), axis=-1,
                   keepdims=True)                                    # [TILE_B, 1]
    corr_tile = jnp.sum((pred == y).astype(jnp.float32))

    acc_sm[0] = acc_sm[0] + loss_tile
    acc_sm[1] = acc_sm[1] + corr_tile

    # Finalize: one divide-by-B, write the two SMEM scalar outputs.
    @pl.when(pid == pl.num_programs(0) - 1)
    def _finalize():
        xe_ref[0, 0] = acc_sm[0] * inv_b
        acc_ref[0, 0] = acc_sm[1] * inv_b


def classification_probe_forward(x, y, weight, bias, *, tile_b=8192):
    """x: [B, n_part_caps] f32, y: [B] int labels,
    weight: [n_classes, n_part_caps] f32 (PyTorch layout), bias: [n_classes] f32.
    Returns (xe, acc) as f32 scalars."""
    B, D = x.shape
    C = weight.shape[0]

    # NOTE: if this probe runs every training step, precompute w_t / b2 once
    # outside the step function instead of re-laying-out here each call.
    w_t = jnp.asarray(weight, jnp.float32).T          # [D, C]
    b2 = jnp.asarray(bias, jnp.float32).reshape(1, C)

    # Tile size: multiple of 8 (sublane), capped by the (rounded-up) batch.
    tile_b = max(8, _round_up(min(tile_b, _round_up(B, 8)), 8))
    b_pad = _round_up(B, tile_b)
    num_tiles = b_pad // tile_b
    pad = b_pad - B

    x_p = jnp.pad(x.astype(jnp.float32), ((0, pad), (0, 0)))
    # Padded rows get label -1: never equal to any class id / argmax result,
    # so they contribute zero to both the loss sum and the correct count.
    y_p = jnp.pad(jnp.asarray(y, jnp.int32).reshape(B, 1),
                  ((0, pad), (0, 0)), constant_values=-1)

    kernel = functools.partial(_probe_kernel, inv_b=float(1.0 / B))

    xe, acc = pl.pallas_call(
        kernel,
        grid=(num_tiles,),
        out_shape=(
            jax.ShapeDtypeStruct((1, 1), jnp.float32),
            jax.ShapeDtypeStruct((1, 1), jnp.float32),
        ),
        in_specs=[
            pl.BlockSpec((tile_b, D), lambda i: (i, 0)),   # x: streamed tiles
            pl.BlockSpec((D, C), lambda i: (0, 0)),        # W^T: resident
            pl.BlockSpec((1, C), lambda i: (0, 0)),        # bias: resident
            pl.BlockSpec((tile_b, 1), lambda i: (i, 0)),   # y: streamed tiles
        ],
        out_specs=(
            pl.BlockSpec(memory_space=pltpu.MemorySpace.SMEM),   # xe
            pl.BlockSpec(memory_space=pltpu.MemorySpace.SMEM),   # acc
        ),
        scratch_shapes=[
            pltpu.SMEM((2,), jnp.float32),   # [loss_sum, correct_count]
        ],
        compiler_params=pltpu.CompilerParams(
            dimension_semantics=("arbitrary",),   # batch axis is a reduction
        ),
    )(x_p, w_t, b2, y_p)

    return xe[0, 0], acc[0, 0]


def _reference(x, y, weight, bias):
    logits = x @ weight.T + bias
    logp = jax.nn.log_softmax(logits, axis=-1)
    xe = -jnp.mean(logp[jnp.arange(x.shape[0]), y])
    acc = jnp.mean((jnp.argmax(logits, axis=1) == y).astype(jnp.float32))
    return xe, acc


if __name__ == "__main__":
    key = jax.random.PRNGKey(0)

    # --- Small deterministic case consistent with the module's forward -----
    B, n_part_caps, n_classes = 8, 32, 16
    kx, ky, kw, kb, key = jax.random.split(key, 5)
    x = jax.random.normal(kx, (B, n_part_caps), dtype=jnp.float32)
    y = jax.random.randint(ky, (B,), 0, n_classes, dtype=jnp.int32)
    bound = 1.0 / jnp.sqrt(jnp.float32(n_part_caps))
    weight = jax.random.uniform(kw, (n_classes, n_part_caps),
                                minval=-bound, maxval=bound, dtype=jnp.float32)
    bias = jax.random.uniform(kb, (n_classes,),
                              minval=-bound, maxval=bound, dtype=jnp.float32)

    xe, acc = classification_probe_forward(x, y, weight, bias)
    jax.block_until_ready((xe, acc))
    xe_ref, acc_ref = _reference(x, y, weight, bias)
    assert jnp.allclose(xe, xe_ref, atol=1e-5), (xe, xe_ref)
    assert jnp.allclose(acc, acc_ref, atol=1e-6), (acc, acc_ref)

    # --- Multi-tile case: exercises the grid, accumulators, and tail pad ---
    B2 = 200                     # not a multiple of the tile -> padded tail
    kx, ky, key = jax.random.split(key, 3)
    x2 = jax.random.normal(kx, (B2, n_part_caps), dtype=jnp.float32)
    y2 = jax.random.randint(ky, (B2,), 0, n_classes, dtype=jnp.int32)

    xe2, acc2 = classification_probe_forward(x2, y2, weight, bias, tile_b=64)
    jax.block_until_ready((xe2, acc2))
    xe2_ref, acc2_ref = _reference(x2, y2, weight, bias)
    assert jnp.allclose(xe2, xe2_ref, atol=1e-5), (xe2, xe2_ref)
    assert jnp.allclose(acc2, acc2_ref, atol=1e-6), (acc2, acc2_ref)

    print("KERNEL_OK")
</pallas_src>

<mosaic_0001>
module attributes {stable_mosaic.version = 11 : i64} {
  func.func @_probe_kernel(%arg0: i32, %arg1: memref<8x32xf32, #tpu.memory_space<vmem>>, %arg2: memref<32x16xf32, #tpu.memory_space<vmem>>, %arg3: memref<1x16xf32, #tpu.memory_space<vmem>>, %arg4: memref<8x1xi32, #tpu.memory_space<vmem>>, %arg5: memref<1x1xf32, #tpu.memory_space<smem>>, %arg6: memref<1x1xf32, #tpu.memory_space<smem>>, %arg7: memref<2xf32, #tpu.memory_space<smem>>) attributes {dimension_semantics = [#tpu.dimension_semantics<arbitrary>], iteration_bounds = array<i64: 1>, scalar_prefetch = 0 : i64, scratch_operands = 1 : i64, tpu.core_type = #tpu.core_type<tc>, window_params = [{transform_indices = @transform_0, window_bounds = array<i64: 8, 32>}, {pipeline_mode = #tpu.pipeline_mode<synchronous>, transform_indices = @transform_1, window_bounds = array<i64: 32, 16>}, {pipeline_mode = #tpu.pipeline_mode<synchronous>, transform_indices = @transform_2, window_bounds = array<i64: 1, 16>}, {transform_indices = @transform_3, window_bounds = array<i64: 8, 1>}, {transform_indices = @transform_4, window_bounds = array<i64: 1, 1>}, {transform_indices = @transform_5, window_bounds = array<i64: 1, 1>}]} {
    %c0_i32 = arith.constant 0 : i32
    %0 = arith.cmpi eq, %arg0, %c0_i32 : i32
    %1 = arith.extui %0 : i1 to i32
    %c0_i32_0 = arith.constant 0 : i32
    %2 = arith.cmpi ne, %1, %c0_i32_0 : i32
    scf.if %2 {
      %cst_19 = arith.constant 0.000000e+00 : f32
      %c0_20 = arith.constant 0 : index
      %54 = memref.load %arg7[%c0_20] : memref<2xf32, #tpu.memory_space<smem>>
      memref.store %cst_19, %arg7[%c0_20] : memref<2xf32, #tpu.memory_space<smem>>
      %cst_21 = arith.constant 0.000000e+00 : f32
      %c1_22 = arith.constant 1 : index
      %55 = memref.load %arg7[%c1_22] : memref<2xf32, #tpu.memory_space<smem>>
      memref.store %cst_21, %arg7[%c1_22] : memref<2xf32, #tpu.memory_space<smem>>
    } else {
    }
    %c0 = arith.constant 0 : index
    %c0_1 = arith.constant 0 : index
    %3 = vector.load %arg1[%c0, %c0_1] : memref<8x32xf32, #tpu.memory_space<vmem>>, vector<8x32xf32>
    %c0_2 = arith.constant 0 : index
    %c0_3 = arith.constant 0 : index
    %4 = vector.load %arg2[%c0_2, %c0_3] : memref<32x16xf32, #tpu.memory_space<vmem>>, vector<32x16xf32>
    %c0_4 = arith.constant 0 : index
    %c0_5 = arith.constant 0 : index
    %5 = vector.load %arg3[%c0_4, %c0_5] : memref<1x16xf32, #tpu.memory_space<vmem>>, vector<1x16xf32>
    %c0_6 = arith.constant 0 : index
    %c0_7 = arith.constant 0 : index
    %6 = vector.load %arg4[%c0_6, %c0_7] : memref<8x1xi32, #tpu.memory_space<vmem>>, vector<8x1xi32>
    %cst = arith.constant dense<0.000000e+00> : vector<8x16xf32>
    %7 = tpu.matmul %3, %4, %cst {dimension_numbers = #tpu.dot_dimension_numbers<[1], [0], [0], [1], [0, 0, 1, 1], [], []>} : vector<8x32xf32>, vector<32x16xf32>, vector<8x16xf32> -> vector<8x16xf32>
    %8 = vector.broadcast %5 : vector<1x16xf32> to vector<8x16xf32>
    %9 = arith.addf %7, %8 : vector<8x16xf32>
    %cst_8 = arith.constant dense<0xFF800000> : vector<8xf32>
    %10 = vector.multi_reduction <maximumf>, %9, %cst_8 [1] : vector<8x16xf32> to vector<8xf32>
    %11 = vector.shape_cast %10 : vector<8xf32> to vector<8x1xf32>
    %12 = vector.broadcast %11 : vector<8x1xf32> to vector<8x16xf32>
    %13 = arith.subf %9, %12 : vector<8x16xf32>
    %14 = math.exp %13 : vector<8x16xf32>
    %cst_9 = arith.constant dense<0.000000e+00> : vector<8xf32>
    %15 = vector.multi_reduction <add>, %14, %cst_9 [1] : vector<8x16xf32> to vector<8xf32>
    %16 = vector.shape_cast %15 : vector<8xf32> to vector<8x1xf32>
    %17 = math.log %16 : vector<8x1xf32>
    %18 = arith.addf %11, %17 : vector<8x1xf32>
    %19 = vector.broadcast %18 : vector<8x1xf32> to vector<8x16xf32>
    %20 = arith.subf %9, %19 : vector<8x16xf32>
    %21 = tpu.iota {dimensions = array<i32: 1>} : vector<8x16xi32>
    %22 = vector.broadcast %6 : vector<8x1xi32> to vector<8x16xi32>
    %23 = arith.cmpi eq, %21, %22 : vector<8x16xi32>
    %24 = arith.extui %23 : vector<8x16xi1> to vector<8x16xi32>
    %25 = arith.sitofp %24 : vector<8x16xi32> to vector<8x16xf32>
    %26 = arith.mulf %25, %20 : vector<8x16xf32>
    %27 = vector.shape_cast %26 : vector<8x16xf32> to vector<1x8x16xf32>
    %cst_10 = arith.constant dense<0.000000e+00> : vector<1xf32>
    %28 = vector.multi_reduction <add>, %27, %cst_10 [1, 2] : vector<1x8x16xf32> to vector<1xf32>
    %29 = vector.shape_cast %28 : vector<1xf32> to vector<1x1x1xf32>
    %30 = vector.extract %29[0, 0, 0] : f32 from vector<1x1x1xf32>
    %cst_11 = arith.constant 0.000000e+00 : f32
    %31 = arith.subf %cst_11, %30 : f32
    %32 = vector.broadcast %11 : vector<8x1xf32> to vector<8x16xf32>
    %33 = arith.cmpf oeq, %9, %32 : vector<8x16xf32>
    %c16_i32 = arith.constant 16 : i32
    %34 = vector.broadcast %c16_i32 : i32 to vector<8x16xi32>
    %35 = arith.select %33, %21, %34 : vector<8x16xi1>, vector<8x16xi32>
    %cst_12 = arith.constant dense<2147483647> : vector<8xi32>
    %36 = vector.multi_reduction <minsi>, %35, %cst_12 [1] : vector<8x16xi32> to vector<8xi32>
    %37 = vector.shape_cast %36 : vector<8xi32> to vector<8x1xi32>
    %38 = arith.cmpi eq, %37, %6 : vector<8x1xi32>
    %39 = arith.extui %38 : vector<8x1xi1> to vector<8x1xi32>
    %40 = arith.sitofp %39 : vector<8x1xi32> to vector<8x1xf32>
    %41 = vector.shape_cast %40 : vector<8x1xf32> to vector<1x8x1xf32>
    %cst_13 = arith.constant dense<0.000000e+00> : vector<1xf32>
    %42 = vector.multi_reduction <add>, %41, %cst_13 [1, 2] : vector<1x8x1xf32> to vector<1xf32>
    %43 = vector.shape_cast %42 : vector<1xf32> to vector<1x1x1xf32>
    %44 = vector.extract %43[0, 0, 0] : f32 from vector<1x1x1xf32>
    %c0_14 = arith.constant 0 : index
    %45 = memref.load %arg7[%c0_14] : memref<2xf32, #tpu.memory_space<smem>>
    %46 = arith.addf %45, %31 : f32
    %c0_15 = arith.constant 0 : index
    %47 = memref.load %arg7[%c0_15] : memref<2xf32, #tpu.memory_space<smem>>
    memref.store %46, %arg7[%c0_15] : memref<2xf32, #tpu.memory_space<smem>>
    %c1 = arith.constant 1 : index
    %48 = memref.load %arg7[%c1] : memref<2xf32, #tpu.memory_space<smem>>
    %49 = arith.addf %48, %44 : f32
    %c1_16 = arith.constant 1 : index
    %50 = memref.load %arg7[%c1_16] : memref<2xf32, #tpu.memory_space<smem>>
    memref.store %49, %arg7[%c1_16] : memref<2xf32, #tpu.memory_space<smem>>
    %c0_i32_17 = arith.constant 0 : i32
    %51 = arith.cmpi eq, %arg0, %c0_i32_17 : i32
    %52 = arith.extui %51 : i1 to i32
    %c0_i32_18 = arith.constant 0 : i32
    %53 = arith.cmpi ne, %52, %c0_i32_18 : i32
    scf.if %53 {
      %c0_19 = arith.constant 0 : index
      %54 = memref.load %arg7[%c0_19] : memref<2xf32, #tpu.memory_space<smem>>
      %cst_20 = arith.constant 1.250000e-01 : f32
      %55 = arith.mulf %54, %cst_20 : f32
      %c0_21 = arith.constant 0 : index
      %c0_22 = arith.constant 0 : index
      %56 = memref.load %arg5[%c0_21, %c0_22] : memref<1x1xf32, #tpu.memory_space<smem>>
      memref.store %55, %arg5[%c0_21, %c0_22] : memref<1x1xf32, #tpu.memory_space<smem>>
      %c1_23 = arith.constant 1 : index
      %57 = memref.load %arg7[%c1_23] : memref<2xf32, #tpu.memory_space<smem>>
      %cst_24 = arith.constant 1.250000e-01 : f32
      %58 = arith.mulf %57, %cst_24 : f32
      %c0_25 = arith.constant 0 : index
      %c0_26 = arith.constant 0 : index
      %59 = memref.load %arg6[%c0_25, %c0_26] : memref<1x1xf32, #tpu.memory_space<smem>>
      memref.store %58, %arg6[%c0_25, %c0_26] : memref<1x1xf32, #tpu.memory_space<smem>>
    } else {
    }
    return
  }
  func.func @transform_0(%arg0: i32) -> (i32, i32) {
    %c0_i32 = arith.constant 0 : i32
    %c0_i32_0 = arith.constant 0 : i32
    return %arg0, %c0_i32 : i32, i32
  }
  func.func @transform_1(%arg0: i32) -> (i32, i32) {
    %c0_i32 = arith.constant 0 : i32
    %c0_i32_0 = arith.constant 0 : i32
    %c0_i32_1 = arith.constant 0 : i32
    return %c0_i32, %c0_i32_0 : i32, i32
  }
  func.func @transform_2(%arg0: i32) -> (i32, i32) {
    %c0_i32 = arith.constant 0 : i32
    %c0_i32_0 = arith.constant 0 : i32
    %c0_i32_1 = arith.constant 0 : i32
    return %c0_i32, %c0_i32_0 : i32, i32
  }
  func.func @transform_3(%arg0: i32) -> (i32, i32) {
    %c0_i32 = arith.constant 0 : i32
    %c0_i32_0 = arith.constant 0 : i32
    return %arg0, %c0_i32 : i32, i32
  }
  func.func @transform_4(%arg0: i32) -> (i32, i32) {
    %c0_i32 = arith.constant 0 : i32
    %c0_i32_0 = arith.constant 0 : i32
    %c0_i32_1 = arith.constant 0 : i32
    return %c0_i32, %c0_i32_0 : i32, i32
  }
  func.func @transform_5(%arg0: i32) -> (i32, i32) {
    %c0_i32 = arith.constant 0 : i32
    %c0_i32_0 = arith.constant 0 : i32
    %c0_i32_1 = arith.constant 0 : i32
    return %c0_i32, %c0_i32_0 : i32, i32
  }
}

</mosaic_0001>

<llo_original>
// kernel: tpu_custom_call.1
$region0: #{tpu_custom_call.1}
  #allocation0 [shape = 'u32[]', space=smem, size = 0x4, offset = 0x4, fixed_abs, tag = 'smem constant byte address 0x4 - core index']
  #allocation1 [shape = 'u32[144,128]{1,0:T(1,128)}', space=vmem, size = 0x12000, scoped, tag = 'internal scratch']
  #allocation2 [shape = 'f32[2]{0:T(128)}', space=smem, size = 0x200, scoped, tag = 'scratch operand']
  %s0 = inlined_call_operand.vmem [shape: f32[8,32], index: 0, kind: input, shape index: {}]
  %s1 = inlined_call_operand.vmem [shape: f32[32,16], index: 1, kind: input, shape index: {}]
  %s2 = inlined_call_operand.vmem [shape: f32[1,16], index: 2, kind: input, shape index: {}]
  %s3 = inlined_call_operand.vmem [shape: s32[8,1], index: 3, kind: input, shape index: {}]
  %s4 = inlined_call_operand.hbm [shape: f32[1,1], index: 4, kind: output, shape index: {0}]
  %s5 = inlined_call_operand.hbm [shape: f32[1,1], index: 5, kind: output, shape index: {1}]
  %6 = xla_tuple %s4, %s5
  %s7 = sld [smem:[#allocation0]]
  $region42: #{tpu_custom_call.1} parent=0
    _
  %s9 = ssub.s32 1, %s7
  %s10 = scalar_select 0, %s9, %s7
  $region1: #{tpu_custom_call.1} parent=0
    #allocation3 [shape = 'u8[512]{0}', space=smem, size = 0x200, scoped, tag = 'output window, operand 0, single buffered']
    #allocation4 [shape = 's32[1]{0}', space=sflag, size = 0x4, scoped, tag = 'scoped memory for tpu_custom_call.1']
    #allocation5 [shape = 'u8[512]{0}', space=smem, size = 0x200, scoped, tag = 'output window, operand 1, single buffered']
    #allocation6 [shape = 's32[1]{0}', space=sflag, size = 0x4, scoped, tag = 'scoped memory for tpu_custom_call.1']
    %11 = vsyncpa [#allocation4], 0
    %12 = vsyncpa [#allocation6], 0
    // Predicated region
    $region2: #{tpu_custom_call.1} parent=1 // pred_check
      _
    $region3: #{tpu_custom_call.1} parent=1 // pred_check_branch
      %14 = sbr.rel (0) target = $region5
    $region4: #{tpu_custom_call.1} parent=1 // pred_region
      _
    $region5: #{tpu_custom_call.1} parent=1 // pred_fallthru
      _
    // Predicated region
    $region6: #{tpu_custom_call.1} parent=1 // pred_check
      _
    $region7: #{tpu_custom_call.1} parent=1 // pred_check_branch
      %16 = sbr.rel (0) target = $region9
    $region8: #{tpu_custom_call.1} parent=1 // pred_region
      _
    $region9: #{tpu_custom_call.1} parent=1 // pred_fallthru
      _
    // Predicated region
    $region10: #{tpu_custom_call.1} parent=1 // pred_check
      _
    $region11: #{tpu_custom_call.1} parent=1 // pred_check_branch
      %18 = sbr.rel (0) target = $region13
    $region12: #{tpu_custom_call.1} parent=1 // pred_region
      _
    $region13: #{tpu_custom_call.1} parent=1 // pred_fallthru
      _
    // Predicated region
    $region14: #{tpu_custom_call.1} parent=1 // pred_check
      _
    $region15: #{tpu_custom_call.1} parent=1 // pred_check_branch
      %20 = sbr.rel (0) target = $region17
    $region16: #{tpu_custom_call.1} parent=1 // pred_region
      _
    $region17: #{tpu_custom_call.1} parent=1 // pred_fallthru
      _
    %p21 = scmp.eq.s32.totalorder 0, 0
    // Predicated region
    $region18: #{tpu_custom_call.1} parent=1 // pred_check
      %p22 = pneg %p21
    $region19: #{tpu_custom_call.1} parent=1 // pred_check_branch
      %24 = sbr.rel (%p22) target = $region21
    $region20: #{tpu_custom_call.1} parent=1 // pred_region
      %s25 = scalar_lea.smem [#allocation2], 0
      %26 = sst [smem:[%s25]] 0.0
      %s27 = scalar_lea.smem [#allocation2], 1
      %28 = sst [smem:[%s27]] 0.0
    $region21: #{tpu_custom_call.1} parent=1 // pred_fallthru
      _
    %v29 = vld [vmem:[%s0] sm:$0xff]
    %v30 = vld [vmem:[%s1] sm:$0xff]
    %v31 = vld [vmem:[%s1 + $0x8] sm:$0xff]
    %v32 = vld [vmem:[%s1 + $0x10] sm:$0xff]
    %v33 = vld [vmem:[%s1 + $0x18] sm:$0xff]
    %v34 = vld [vmem:[%s2] sm:$0x1]
    %v35 = vld [vmem:[%s3] sm:$0xff]
    %v37 = vlaneseq
    %v38 = vshrl.u32 %v37, 7
    %v39 = vsub.s32 0, %v38
    %v40 = vrot.slane %v34, %v39
    %vm42 = vcmask 261120
    %v44 = vsel %vm42, %v29, 0
    %46 = vmatprep.subr.mxu0 0.0
    %47 = vmatpush1.msra.mxu0 %v30
    %48 = vmatprep.subr.mxu0 0.0
    %49 = vmatpush1.msra.mxu0 %v31
    %50 = vmatprep.subr.mxu0 0.0
    %51 = vmatpush1.msra.mxu0 %v32
    %52 = vmatprep.subr.mxu0 0.0
    %53 = vmatpush1.msra.mxu0 %v33
    %54 = vmatprep.subr.mxu0 0.0
    %55 = vmatpush1.msra.mxu0 0.0
    %56 = vmatprep.subr.mxu0 0.0
    %57 = vmatpush1.msra.mxu0 0.0
    %58 = vmatprep.subr.mxu0 0.0
    %59 = vmatpush1.msra.mxu0 0.0
    %60 = vmatprep.subr.mxu0 0.0
    %61 = vmatpush1.msra.mxu0 0.0
    %62 = vmatprep.subr.mxu0 0.0
    %63 = vmatpush1.msra.mxu0 0.0
    %64 = vmatprep.subr.mxu0 0.0
    %65 = vmatpush1.msra.mxu0 0.0
    %66 = vmatprep.subr.mxu0 0.0
    %67 = vmatpush1.msra.mxu0 0.0
    %68 = vmatprep.subr.mxu0 0.0
    %69 = vmatpush1.msra.mxu0 0.0
    %70 = vmatprep.subr.mxu0 0.0
    %71 = vmatpush1.msra.mxu0 0.0
    %72 = vmatprep.subr.mxu0 0.0
    %73 = vmatpush1.msra.mxu0 0.0
    %74 = vmatprep.subr.mxu0 0.0
    %75 = vmatpush1.msra.mxu0 0.0
    %76 = vmatprep.subr.mxu0 0.0
    %77 = vmatpush1.msra.mxu0 0.0
    %78 = vmatprep.subr.mxu0 0.0
    %79 = vmatpush1.msra.mxu0 0.0
    %80 = vmatprep.subr.mxu0 0.0
    %81 = vmatpush1.msra.mxu0 0.0
    %82 = vmatprep.subr.mxu0 0.0
    %83 = vmatpush1.msra.mxu0 0.0
    %84 = vmatprep.subr.mxu0 0.0
    %85 = vmatpush1.msra.mxu0 0.0
    %86 = vmatprep.subr.mxu0 0.0
    %87 = vmatpush1.msra.mxu0 0.0
    %88 = vmatprep.subr.mxu0 0.0
    %89 = vmatpush1.msra.mxu0 0.0
    %90 = vmatprep.subr.mxu0 0.0
    %91 = vmatpush1.msra.mxu0 0.0
    %92 = vmatprep.subr.mxu0 0.0
    %93 = vmatpush1.msra.mxu0 0.0
    %94 = vmatprep.subr.mxu0 0.0
    %95 = vmatpush1.msra.mxu0 0.0
    %96 = vmatprep.subr.mxu0 0.0
    %97 = vmatpush1.msra.mxu0 0.0
    %98 = vmatprep.subr.mxu0 0.0
    %99 = vmatpush1.msra.mxu0 0.0
    %100 = vmatprep.subr.mxu0 0.0
    %101 = vmatpush1.msra.mxu0 0.0
    %102 = vmatprep.subr.mxu0 0.0
    %103 = vmatpush1.msra.mxu0 0.0
    %104 = vmatprep.subr.mxu0 0.0
    %105 = vmatpush1.msra.mxu0 0.0
    %106 = vmatprep.subr.mxu0 0.0
    %107 = vmatpush1.msra.mxu0 0.0
    %108 = vmatprep.subr.mxu0 0.0
    %109 = vmatpush1.msra.mxu0 0.0
    %110 = vmatprep.mubr.f32.mxu0 0.0
    %111 = vmatmul.mubr.f32.gmra.mrb[0].mxu0 %v44
    %v112 = vpop.f32.mrb[0].mxu0
    %v113 = vadd.f32 %v40, %v112
    %v114 = vpop.f32.mrb[0].mxu0
    %115 = vdwg.mxu0
    %vm116 = vcmask 130048
    %v117 = vsel %vm116, %v113, -inf
    %118 = vmax.xlane.f32.xlu0 %v117
    %v119 = vpop.xlane.xlu0 %118
    %v120 = vsub.f32 %v113, %v119
    %v121 = vmul.f32 %v120, 1.442695
    %v122 = vpow.pop %v121
    %v123 = vsel %vm116, %v122, 0.0
    %124 = vadd.xlane.f32.xlu0 %v123
    %v125 = vpop.xlane.xlu0 %124
    %v126 = vlog2.pop %v125
    %v127 = vmul.f32 %v126, 0.6931472
    %v128 = vadd.f32 %v119, %v127
    %v129 = vsub.f32 %v113, %v128
    %v130 = vlaneseq
    %v131 = vand.u32 %v130, 127
    %132 = vset.pattern.permute.xlu0 0
    %133 = vperm.xlu0 %132, %v35
    %v134 = vpop.permute.xlu0 %133
    %vm135 = vcmp.eq.s32.totalorder %v131, %v134
    %v136 = vsel %vm135, 1, 0
    %v137 = vcvt.s32.f32 %v136
    %v138 = vmul.f32 %v137, %v129
    %v139 = vsel %vm116, %v138, 0.0
    %140 = vadd.xlane.f32.xlu0 %v139
    %v141 = vpop.xlane.xlu0 %140
    %v142 = vrot.slane %v141, 4
    %v143 = vadd.f32 %v141, %v142
    %v144 = vrot.slane %v143, 2
    %v145 = vadd.f32 %v143, %v144
    %v146 = vrot.slane %v145, 1
    %v147 = vadd.f32 %v145, %v146
    %s148 = vtos %v147
    %s149 = ssub.f32 0.0, %s148
    %vm150 = vcmp.eq.f32.partialorder %v113, %v119
    %v151 = vsel %vm150, %v131, 16
    %v152 = vsel %vm116, %v151, 2147483647
    %v153 = vand.u32 %v152, 65535
    %v154 = vshra.s32 %v152, 16
    %v155 = vcvt.s32.f32 %v153
    %v156 = vcvt.s32.f32 %v154
    %157 = vmin.xlane.f32.xlu0 %v156
    %v158 = vpop.xlane.xlu0 %157
    %vm159 = vcmp.eq.f32.partialorder %v156, %v158
    %v160 = vsel %vm159, %v155, inf
    %161 = vmin.xlane.f32.xlu0 %v160
    %v162 = vpop.xlane.xlu0 %161
    %v163 = vcvt.f32.s32 %v162
    %v164 = vcvt.f32.s32 %v158
    %v165 = vshll.u32 %v164, 16
    %v166 = vadd.s32 %v165, %v163
    %vm167 = vcmp.eq.s32.totalorder %v166, %v35
    %v168 = vsel %vm167, 1, 0
    %v169 = vcvt.s32.f32 %v168
    %vm170 = vcmask 7168
    %v171 = vsel %vm170, %v169, 0.0
    %172 = vadd.xlane.f32.xlu0 %v171
    %v173 = vpop.xlane.xlu0 %172
    %v174 = vrot.slane %v173, 4
    %v175 = vadd.f32 %v173, %v174
    %v176 = vrot.slane %v175, 2
    %v177 = vadd.f32 %v175, %v176
    %v178 = vrot.slane %v177, 1
    %v179 = vadd.f32 %v177, %v178
    %s180 = vtos %v179
    %s181 = sld [smem:[#allocation2]]
    %s182 = sadd.f32 %s181, %s149
    %s183 = scalar_lea.smem [#allocation2], 0
    %184 = sst [smem:[%s183]] %s182
    %s185 = sld [smem:[#allocation2 + $0x1]]
    %s186 = sadd.f32 %s185, %s180
    %s187 = scalar_lea.smem [#allocation2], 1
    %188 = sst [smem:[%s187]] %s186
    // Predicated region
    $region22: #{tpu_custom_call.1} parent=1 // pred_check
      %p189 = pneg %p21
    $region23: #{tpu_custom_call.1} parent=1 // pred_check_branch
      %191 = sbr.rel (%p189) target = $region25
    $region24: #{tpu_custom_call.1} parent=1 // pred_region
      %s192 = sld [smem:[#allocation2]]
      %s193 = smul.f32 %s192, 0.125
      %s194 = scalar_lea.smem [#allocation3], 0
      %195 = sst [smem:[%s194]] %s193
      %s196 = sld [smem:[#allocation2 + $0x1]]
      %s197 = smul.f32 %s196, 0.125
      %s198 = scalar_lea.smem [#allocation5], 0
      %199 = sst [smem:[%s198]] %s197
    $region25: #{tpu_custom_call.1} parent=1 // pred_fallthru
      _
    // Predicated region
    $region26: #{tpu_custom_call.1} parent=1 // pred_check
      _
    $region27: #{tpu_custom_call.1} parent=1 // pred_check_branch
      %201 = sbr.rel (0) target = $region29
    $region28: #{tpu_custom_call.1} parent=1 // pred_region
      %s203 = ssub.s32 16, 16
      %204 = vsyncadd [#allocation4], %s203
      %207 = dma.smem_to_hbm [#allocation3], 16, %s4, [#allocation4]
    $region29: #{tpu_custom_call.1} parent=1 // pred_fallthru
      _
    // Predicated region
    $region30: #{tpu_custom_call.1} parent=1 // pred_check
      _
    $region31: #{tpu_custom_call.1} parent=1 // pred_check_branch
      %209 = sbr.rel (0) target = $region33
    $region32: #{tpu_custom_call.1} parent=1 // pred_region
      %s211 = ssub.s32 16, 16
      %212 = vsyncadd [#allocation6], %s211
      %215 = dma.smem_to_hbm [#allocation5], 16, %s5, [#allocation6]
    $region33: #{tpu_custom_call.1} parent=1 // pred_fallthru
      _
    // Predicated region
    $region34: #{tpu_custom_call.1} parent=1 // pred_check
      _
    $region35: #{tpu_custom_call.1} parent=1 // pred_check_branch
      %217 = sbr.rel (0) target = $region37
    $region36: #{tpu_custom_call.1} parent=1 // pred_region
      %218 = dma.done [#allocation4], 16
    $region37: #{tpu_custom_call.1} parent=1 // pred_fallthru
      _
    // Predicated region
    $region38: #{tpu_custom_call.1} parent=1 // pred_check
      _
    $region39: #{tpu_custom_call.1} parent=1 // pred_check_branch
      %220 = sbr.rel (0) target = $region41
    $region40: #{tpu_custom_call.1} parent=1 // pred_region
      %221 = dma.done [#allocation6], 16
    $region41: #{tpu_custom_call.1} parent=1 // pred_fallthru
      _
    %222 = sfence
    %223 = vsyncpa [#allocation4], 1
    %224 = vsyncpa [#allocation6], 1

</llo_original>
